<compile_context>
chip_gen: v5e
topology: v5e:2x2
jax: 0.10.0
libtpu: 0.0.40
codegen_flags: <defaults>
</compile_context>

<pallas_src>
import jax
import jax.numpy as jnp
from jax.experimental import pallas as pl
from jax.experimental.pallas import tpu as pltpu

HIDDEN = 30  # nn.Linear(s_dim, 30) / nn.Linear(a_dim, 30) / nn.Linear(30, 1)


def make_critic_kernel(s_dim, a_dim):
    """Kernel factory; row offsets into the packed weight buffer are static."""
    row_bh = s_dim + a_dim      # fused hidden bias (bs + ba)
    row_wo = row_bh + 1         # output weight, stored as a (1, HIDDEN) row
    row_bo = row_wo + 1         # output bias, stored in column 0

    def critic_kernel(s_ref, a_ref, w_ref, q_ref):
        # Two MXU passes (s-path and a-path) accumulating in f32.
        h = jnp.dot(s_ref[...], w_ref[:s_dim, :],
                    preferred_element_type=jnp.float32)
        h = h + jnp.dot(a_ref[...], w_ref[s_dim:s_dim + a_dim, :],
                        preferred_element_type=jnp.float32)
        h = jnp.maximum(h + w_ref[row_bh:row_bh + 1, :], 0.0)
        # 30 -> 1 projection: VPU multiply + XLU cross-lane reduce (MXU stays
        # out of it), plus the scalar output bias broadcast from the packed
        # buffer.
        q = jnp.sum(h * w_ref[row_wo:row_wo + 1, :], axis=-1, keepdims=True)
        q_ref[...] = q + w_ref[row_bo:row_bo + 1, 0:1]

    return critic_kernel


def fold_params(params):
    """Fold raw params once into a single packed (s_dim+a_dim+3, HIDDEN) buffer."""
    ws, bs, wa, ba, wo, bo = params
    b_h = bs + ba                                       # (1, HIDDEN)
    wo_row = jnp.transpose(wo)                          # (1, HIDDEN)
    bo_row = jnp.zeros((1, HIDDEN), jnp.float32).at[0, 0].set(bo[0, 0])
    w_all = jnp.concatenate([ws, wa, b_h, wo_row, bo_row], axis=0)
    return w_all                                        # (s_dim+a_dim+3, HIDDEN)


def critic_forward(s, a, w_all, *, batch_block=512):
    """s: (B, s_dim), a: (B, a_dim), w_all: packed params -> (B, 1)."""
    B, s_dim = s.shape
    a_dim = a.shape[1]
    k_rows, hidden = w_all.shape
    kernel = make_critic_kernel(s_dim, a_dim)

    cost = pl.CostEstimate(
        flops=2 * B * (s_dim + a_dim + 1) * hidden,
        transcendentals=0,
        bytes_accessed=4 * (s.size + a.size + w_all.size + B),
    )

    vmem = pl.BlockSpec(memory_space=pltpu.MemorySpace.VMEM)

    if B <= batch_block:
        # Gridless: everything is tiny; a grid would be pure per-step overhead.
        return pl.pallas_call(
            kernel,
            out_shape=jax.ShapeDtypeStruct((B, 1), jnp.float32),
            in_specs=[vmem, vmem, vmem],
            out_specs=vmem,
            cost_estimate=cost,
        )(s, a, w_all)

    # Large-batch path: 1-D grid over batch blocks; weights stay VMEM-resident
    # (constant index_map); batch axis marked parallel so v7x's second
    # TensorCore shares the work (no effect on single-TC v5e/v6e).
    tb = batch_block
    pad = (-B) % tb
    if pad:
        s = jnp.pad(s, ((0, pad), (0, 0)))
        a = jnp.pad(a, ((0, pad), (0, 0)))
    bp = B + pad
    # TODO(synk): if B grows to many thousands, emit q lane-dense (batch on the
    # lane axis) to avoid masked vst.msk partial stores on the (TB, 1) output.
    q = pl.pallas_call(
        kernel,
        out_shape=jax.ShapeDtypeStruct((bp, 1), jnp.float32),
        grid=(bp // tb,),
        in_specs=[
            pl.BlockSpec((tb, s_dim), lambda i: (i, 0)),
            pl.BlockSpec((tb, a_dim), lambda i: (i, 0)),
            pl.BlockSpec((k_rows, hidden), lambda i: (0, 0)),
        ],
        out_specs=pl.BlockSpec((tb, 1), lambda i: (i, 0)),
        compiler_params=pltpu.CompilerParams(
            dimension_semantics=("parallel",),
            vmem_limit_bytes=32 << 20,
        ),
        cost_estimate=cost,
    )(s, a, w_all)
    return q[:B]


def init_params(key, s_dim, a_dim):
    """Deterministic parameter init mirroring CriticNet.__init__:
       weights ~ Normal(mean=0, std=0.1); biases keep the PyTorch Linear
       default U(-1/sqrt(fan_in), 1/sqrt(fan_in)).
       Weights stored as (in_features, out_features) == PyTorch weight.T."""
    k = jax.random.split(key, 6)
    ws = 0.1 * jax.random.normal(k[0], (s_dim, HIDDEN), jnp.float32)
    wa = 0.1 * jax.random.normal(k[1], (a_dim, HIDDEN), jnp.float32)
    wo = 0.1 * jax.random.normal(k[2], (HIDDEN, 1), jnp.float32)
    bs = jax.random.uniform(k[3], (1, HIDDEN), jnp.float32,
                            -1.0 / jnp.sqrt(s_dim), 1.0 / jnp.sqrt(s_dim))
    ba = jax.random.uniform(k[4], (1, HIDDEN), jnp.float32,
                            -1.0 / jnp.sqrt(a_dim), 1.0 / jnp.sqrt(a_dim))
    bo = jax.random.uniform(k[5], (1, 1), jnp.float32,
                            -1.0 / jnp.sqrt(HIDDEN), 1.0 / jnp.sqrt(HIDDEN))
    return ws, bs, wa, ba, wo, bo


def reference_forward(s, a, params):
    ws, bs, wa, ba, wo, bo = params
    return jnp.maximum(s @ ws + bs + a @ wa + ba, 0.0) @ wo + bo


if __name__ == "__main__":
    key = jax.random.PRNGKey(0)
    k_s, k_a, k_p = jax.random.split(key, 3)

    # Small shapes consistent with the module: batch=2, s_dim=32, a_dim=8.
    B, S_DIM, A_DIM = 2, 32, 8
    s = jax.random.normal(k_s, (B, S_DIM), jnp.float32)
    a = jax.random.normal(k_a, (B, A_DIM), jnp.float32)
    params = init_params(k_p, S_DIM, A_DIM)
    w_all = fold_params(params)

    q = critic_forward(s, a, w_all)
    q = jax.block_until_ready(q)
    q_ref = reference_forward(s, a, params)
    assert q.shape == (B, 1)
    assert jnp.allclose(q, q_ref, atol=1e-5), (q, q_ref)

    # Secondary check: large-batch gridded path (batch grid + parallel
    # semantics + padding), kept modest in size.
    B2 = 1000
    s2 = jax.random.normal(jax.random.PRNGKey(1), (B2, S_DIM), jnp.float32)
    a2 = jax.random.normal(jax.random.PRNGKey(2), (B2, A_DIM), jnp.float32)
    q2 = critic_forward(s2, a2, w_all, batch_block=256)
    q2 = jax.block_until_ready(q2)
    q2_ref = reference_forward(s2, a2, params)
    assert q2.shape == (B2, 1)
    assert jnp.allclose(q2, q2_ref, atol=1e-4, rtol=1e-4), "large-batch mismatch"

    print("KERNEL_OK")
</pallas_src>

<mosaic_0001>
module attributes {stable_mosaic.version = 11 : i64} {
  func.func @critic_kernel(%arg0: memref<2x32xf32, #tpu.memory_space<vmem>>, %arg1: memref<2x8xf32, #tpu.memory_space<vmem>>, %arg2: memref<43x30xf32, #tpu.memory_space<vmem>>, %arg3: memref<2x1xf32, #tpu.memory_space<vmem>>) attributes {dimension_semantics = [], scalar_prefetch = 0 : i64, scratch_operands = 0 : i64, tpu.core_type = #tpu.core_type<tc>} {
    %c0 = arith.constant 0 : index
    %c0_0 = arith.constant 0 : index
    %0 = vector.load %arg0[%c0, %c0_0] : memref<2x32xf32, #tpu.memory_space<vmem>>, vector<2x32xf32>
    %c0_1 = arith.constant 0 : index
    %c0_2 = arith.constant 0 : index
    %1 = vector.load %arg2[%c0_1, %c0_2] : memref<43x30xf32, #tpu.memory_space<vmem>>, vector<32x30xf32>
    %cst = arith.constant dense<0.000000e+00> : vector<2x30xf32>
    %2 = tpu.matmul %0, %1, %cst {dimension_numbers = #tpu.dot_dimension_numbers<[1], [0], [0], [1], [0, 0, 1, 1], [], []>} : vector<2x32xf32>, vector<32x30xf32>, vector<2x30xf32> -> vector<2x30xf32>
    %c0_3 = arith.constant 0 : index
    %c0_4 = arith.constant 0 : index
    %3 = vector.load %arg1[%c0_3, %c0_4] : memref<2x8xf32, #tpu.memory_space<vmem>>, vector<2x8xf32>
    %c32 = arith.constant 32 : index
    %c0_5 = arith.constant 0 : index
    %4 = vector.load %arg2[%c32, %c0_5] : memref<43x30xf32, #tpu.memory_space<vmem>>, vector<8x30xf32>
    %cst_6 = arith.constant dense<0.000000e+00> : vector<2x30xf32>
    %5 = tpu.matmul %3, %4, %cst_6 {dimension_numbers = #tpu.dot_dimension_numbers<[1], [0], [0], [1], [0, 0, 1, 1], [], []>} : vector<2x8xf32>, vector<8x30xf32>, vector<2x30xf32> -> vector<2x30xf32>
    %6 = arith.addf %2, %5 : vector<2x30xf32>
    %c40 = arith.constant 40 : index
    %c0_7 = arith.constant 0 : index
    %7 = vector.load %arg2[%c40, %c0_7] : memref<43x30xf32, #tpu.memory_space<vmem>>, vector<1x30xf32>
    %8 = vector.broadcast %7 : vector<1x30xf32> to vector<2x30xf32>
    %9 = arith.addf %6, %8 : vector<2x30xf32>
    %cst_8 = arith.constant 0.000000e+00 : f32
    %10 = vector.broadcast %cst_8 : f32 to vector<2x30xf32>
    %11 = arith.maximumf %9, %10 : vector<2x30xf32>
    %c41 = arith.constant 41 : index
    %c0_9 = arith.constant 0 : index
    %12 = vector.load %arg2[%c41, %c0_9] : memref<43x30xf32, #tpu.memory_space<vmem>>, vector<1x30xf32>
    %13 = vector.broadcast %12 : vector<1x30xf32> to vector<2x30xf32>
    %14 = arith.mulf %11, %13 : vector<2x30xf32>
    %cst_10 = arith.constant dense<0.000000e+00> : vector<2xf32>
    %15 = vector.multi_reduction <add>, %14, %cst_10 [1] : vector<2x30xf32> to vector<2xf32>
    %16 = vector.shape_cast %15 : vector<2xf32> to vector<2x1xf32>
    %c42 = arith.constant 42 : index
    %c0_11 = arith.constant 0 : index
    %17 = vector.load %arg2[%c42, %c0_11] : memref<43x30xf32, #tpu.memory_space<vmem>>, vector<1x1xf32>
    %18 = vector.broadcast %17 : vector<1x1xf32> to vector<2x1xf32>
    %19 = arith.addf %16, %18 : vector<2x1xf32>
    %c0_12 = arith.constant 0 : index
    %c0_13 = arith.constant 0 : index
    %20 = vector.load %arg3[%c0_12, %c0_13] : memref<2x1xf32, #tpu.memory_space<vmem>>, vector<2x1xf32>
    tpu.vector_store %arg3[%c0_12, %c0_13], %19 {strides = array<i32>} : memref<2x1xf32, #tpu.memory_space<vmem>>, vector<2x1xf32>,
    return
  }
}

</mosaic_0001>

<llo_original>
// kernel: tpu_custom_call.1
$region0: #{tpu_custom_call.1}
  #allocation0 [shape = 'u32[]', space=smem, size = 0x4, offset = 0x4, fixed_abs, tag = 'smem constant byte address 0x4 - core index']
  #allocation1 [shape = 'u32[72,128]{1,0:T(1,128)}', space=vmem, size = 0x9000, scoped, tag = 'internal scratch']
  %s0 = inlined_call_operand.vmem [shape: f32[2,32], index: 0, kind: input, shape index: {}]
  %s1 = inlined_call_operand.vmem [shape: f32[2,8], index: 1, kind: input, shape index: {}]
  %s2 = inlined_call_operand.vmem [shape: f32[43,30], index: 2, kind: input, shape index: {}]
  %s3 = inlined_call_operand.vmem [shape: f32[2,1], index: 3, kind: output, shape index: {}]
  %s4 = sld [smem:[#allocation0]]
  $region22: #{tpu_custom_call.1} parent=0
    _
  %s6 = ssub.s32 1, %s4
  %s7 = scalar_select 0, %s6, %s4
  // Predicated region
  $region2: #{tpu_custom_call.1} parent=0 // pred_check
    _
  $region3: #{tpu_custom_call.1} parent=0 // pred_check_branch
    %9 = sbr.rel (0) target = $region5
  $region4: #{tpu_custom_call.1} parent=0 // pred_region
    _
  $region5: #{tpu_custom_call.1} parent=0 // pred_fallthru
    _
  // Predicated region
  $region6: #{tpu_custom_call.1} parent=0 // pred_check
    _
  $region7: #{tpu_custom_call.1} parent=0 // pred_check_branch
    %11 = sbr.rel (0) target = $region9
  $region8: #{tpu_custom_call.1} parent=0 // pred_region
    _
  $region9: #{tpu_custom_call.1} parent=0 // pred_fallthru
    _
  // Predicated region
  $region10: #{tpu_custom_call.1} parent=0 // pred_check
    _
  $region11: #{tpu_custom_call.1} parent=0 // pred_check_branch
    %13 = sbr.rel (0) target = $region13
  $region12: #{tpu_custom_call.1} parent=0 // pred_region
    _
  $region13: #{tpu_custom_call.1} parent=0 // pred_fallthru
    _
  %v14 = vld [vmem:[%s0] sm:$0x3]
  %v15 = vld [vmem:[%s2] sm:$0xff]
  %v16 = vld [vmem:[%s2 + $0x8] sm:$0xff]
  %v17 = vld [vmem:[%s2 + $0x10] sm:$0xff]
  %v18 = vld [vmem:[%s2 + $0x18] sm:$0xff]
  %v19 = vld [vmem:[%s1] sm:$0x3]
  %v20 = vld [vmem:[%s2 + $0x20] sm:$0xff]
  %vm21 = vcmask 64512
  %v23 = vsel %vm21, %v19, 0
  %25 = vmatpush.msra.mxu0 0.0
  %26 = vmatpush.msra.mxu0 0.0
  %27 = vmatpush.msra.mxu0 0.0
  %28 = vmatpush.msra.mxu0 0.0
  %29 = vmatpush.msra.mxu0 0.0
  %30 = vmatpush.msra.mxu0 0.0
  %31 = vmatpush.msra.mxu0 0.0
  %32 = vmatpush.msra.mxu0 0.0
  %33 = vmatpush.msra.mxu0 0.0
  %34 = vmatpush.msra.mxu0 0.0
  %35 = vmatpush.msra.mxu0 0.0
  %36 = vmatpush.msra.mxu0 0.0
  %37 = vmatpush.msra.mxu0 0.0
  %38 = vmatpush.msra.mxu0 0.0
  %39 = vmatpush.msra.mxu0 0.0
  %40 = vmatpush.msra.mxu0 %v20
  %41 = vmatmul.f32.gmra.mxu0 %v23
  %v42 = vpop.f32.mrf.mxu0
  %v43 = vadd.f32 0.0, %v42
  %44 = vdwg.mxu0
  %vm45 = vcmask 261120
  %v47 = vsel %vm45, %v14, 0
  %49 = vmatpush.msra.mxu0 0.0
  %50 = vmatpush.msra.mxu0 0.0
  %51 = vmatpush.msra.mxu0 0.0
  %52 = vmatpush.msra.mxu0 0.0
  %53 = vmatpush.msra.mxu0 0.0
  %54 = vmatpush.msra.mxu0 0.0
  %55 = vmatpush.msra.mxu0 0.0
  %56 = vmatpush.msra.mxu0 0.0
  %57 = vmatpush.msra.mxu0 0.0
  %58 = vmatpush.msra.mxu0 0.0
  %59 = vmatpush.msra.mxu0 0.0
  %60 = vmatpush.msra.mxu0 0.0
  %61 = vmatpush.msra.mxu0 %v18
  %62 = vmatpush.msra.mxu0 %v17
  %63 = vmatpush.msra.mxu0 %v16
  %64 = vmatpush.msra.mxu0 %v15
  %65 = vmatmul.f32.gmra.mxu0 %v47
  %v66 = vpop.f32.mrf.mxu0
  %v67 = vadd.f32 %v43, %v66
  %68 = vdwg.mxu0
  %v69 = vld [vmem:[%s2 + $0x28] sm:$0x1]
  %v70 = vperm.slane %v69, 0
  %v71 = vadd.f32 %v67, %v70
  %v72 = vmax.f32 %v71, 0.0
  %v73 = vld [vmem:[%s2 + $0x29] sm:$0x1]
  %v74 = vperm.slane %v73, 0
  %v75 = vmul.f32 %v72, %v74
  %vm76 = vcmask 238592
  %v77 = vsel %vm76, %v75, 0.0
  %78 = vadd.xlane.f32.xlu0 %v77
  %v79 = vpop.xlane.xlu0 %78
  %v80 = vld [vmem:[%s2 + $0x2a] sm:$0x1]
  %v81 = vperm.slane %v80, 0
  %v82 = vadd.f32 %v79, %v81
  %vm83 = vcmask 1024
  %84 = vst.msk [vmem:[%s3] sm:$0x3] %vm83, %v82
  // Predicated region
  $region14: #{tpu_custom_call.1} parent=0 // pred_check
    _
  $region15: #{tpu_custom_call.1} parent=0 // pred_check_branch
    %86 = sbr.rel (0) target = $region17
  $region16: #{tpu_custom_call.1} parent=0 // pred_region
    _
  $region17: #{tpu_custom_call.1} parent=0 // pred_fallthru
    _
  // Predicated region
  $region18: #{tpu_custom_call.1} parent=0 // pred_check
    _
  $region19: #{tpu_custom_call.1} parent=0 // pred_check_branch
    %88 = sbr.rel (0) target = $region21
  $region20: #{tpu_custom_call.1} parent=0 // pred_region
    _
  $region21: #{tpu_custom_call.1} parent=0 // pred_fallthru
    _

</llo_original>
